<compile_context>
chip_gen: v7x
topology: tpu7x:2x2x1
jax: 0.10.0
libtpu: 0.0.40
codegen_flags: <defaults>
</compile_context>

<pallas_src>
import jax
import jax.numpy as jnp
from jax import lax
from jax.experimental import pallas as pl
from jax.experimental.pallas import tpu as pltpu


def _round_up(x, m):
    return (x + m - 1) // m * m


# --------------------------------------------------------------------------
# Fast path: whole K in one shot, w1 VMEM-resident, no accumulator scratch.
# --------------------------------------------------------------------------
def _fc_single_kernel(x_ref, w1_ref, w2_ref, o_ref):
    # fc1: w1 (nh, nf) . x (TM, nf)^T -> (nh, TM); batch on the lane axis.
    h = lax.dot_general(
        w1_ref[...],
        x_ref[...],
        dimension_numbers=(((1,), (1,)), ((), ())),
        preferred_element_type=jnp.float32,
    )
    # fc2: w2 (no, nh) . h (nh, TM) -> (no, TM); lane-dense output tile.
    o_ref[...] = lax.dot_general(
        w2_ref[...],
        h,
        dimension_numbers=(((1,), (0,)), ((), ())),
        preferred_element_type=jnp.float32,
    ).astype(o_ref.dtype)


# --------------------------------------------------------------------------
# Fallback path: K-tiled reduction with a (nh, TM) f32 accumulator.
# --------------------------------------------------------------------------
def _fc_ktiled_kernel(x_ref, w1_ref, w2_ref, o_ref, acc_ref):
    k = pl.program_id(1)

    @pl.when(k == 0)
    def _init():
        acc_ref[...] = jnp.zeros_like(acc_ref)

    # Partial fc1: w1 (nh, tk) . x (TM, tk)^T -> (nh, TM), f32 accumulate.
    acc_ref[...] += lax.dot_general(
        w1_ref[...],
        x_ref[...],
        dimension_numbers=(((1,), (1,)), ((), ())),
        preferred_element_type=jnp.float32,
    )

    @pl.when(k == pl.num_programs(1) - 1)
    def _finalize():
        # fc2: w2 (no, nh) . acc (nh, TM) -> (no, TM).
        o_ref[...] = lax.dot_general(
            w2_ref[...],
            acc_ref[...],
            dimension_numbers=(((1,), (0,)), ((), ())),
            preferred_element_type=jnp.float32,
        ).astype(o_ref.dtype)


def fc_net_1_forward(x, w1, w2, *, block_m=128, block_k=1024, compute_dtype=None):
    """Pallas equivalent of fc_net_1.forward.

    Args:
      x:  (B, C, H, W) input (NCHW, like PyTorch).
      w1: (num_hidden_1, num_input)  -- PyTorch Linear weight layout (out, in).
      w2: (num_output, num_hidden_1) -- PyTorch Linear weight layout (out, in).
      compute_dtype: optional streamed-operand dtype (e.g. jnp.bfloat16) to
        halve HBM bytes on memory-bound configs; accumulation stays f32.

    Returns:
      (B,) if num_output == 1 (matching .squeeze(1)), else (B, num_output).
    """
    B = x.shape[0]
    nh, nf = w1.shape          # num_hidden_1, num_input
    no = w2.shape[0]           # num_output
    out_dtype = x.dtype

    x_flat = x.reshape(B, -1)  # nn.Flatten(): row-major flatten of C,H,W
    assert x_flat.shape[1] == nf, (x_flat.shape, nf)

    if compute_dtype is not None:
        x_flat = x_flat.astype(compute_dtype)
        w1 = w1.astype(compute_dtype)
        w2 = w2.astype(compute_dtype)

    # ---- tile sizing / padding ------------------------------------------
    # K: pad only to a lane multiple (128), never to tk.
    nf_pad = _round_up(nf, 128)
    # M: pad to a sublane multiple and tile; with the flipped orientation TM
    # is the MXU output-lane axis, so big M tiles fill the lanes.
    b_pad = _round_up(B, 8)
    tm = min(_round_up(block_m, 8), b_pad)
    b_pad = _round_up(b_pad, tm)
    # NOTE: on v7x, splitting a single M tile in two would let the second
    # TensorCore help, but at these sizes the kernel is weight-bandwidth
    # bound (shared HBM), so we keep full-lane tiles instead.

    if (b_pad, nf_pad) != x_flat.shape:
        x_flat = jnp.pad(x_flat, ((0, b_pad - B), (0, nf_pad - nf)))
    if nf_pad != nf:
        w1 = jnp.pad(w1, ((0, 0), (0, nf_pad - nf)))

    itemsize = x_flat.dtype.itemsize
    w_itemsize = w1.dtype.itemsize
    out_itemsize = jnp.dtype(out_dtype).itemsize
    vmem_soft_cap = 48 * 1024 * 1024   # headroom under v7x's 64 MiB physical

    # Can the whole K axis live in VMEM at once (w1 resident, x double-buf)?
    single_need = (
        2 * tm * nf_pad * itemsize        # x tiles (double-buffered)
        + 2 * nh * nf_pad * w_itemsize    # w1 (resident whole-array block)
        + 2 * no * nh * w_itemsize        # w2 (tiny, resident)
        + 2 * no * tm * out_itemsize      # output tiles
    )

    if single_need <= vmem_soft_cap:
        # -------- single-pass path (default shapes land here) ------------
        kernel = _fc_single_kernel
        grid = (b_pad // tm,)
        in_specs = [
            pl.BlockSpec((tm, nf_pad), lambda i: (i, 0)),   # x: fresh per M tile
            pl.BlockSpec((nh, nf_pad), lambda i: (0, 0)),   # w1: VMEM-resident
            pl.BlockSpec((no, nh), lambda i: (0, 0)),       # w2: VMEM-resident
        ]
        out_specs = pl.BlockSpec((no, tm), lambda i: (0, i))
        scratch_shapes = []
        dim_sem = ("parallel",)
        vmem_need = single_need
    else:
        # -------- K-tiled fallback ---------------------------------------
        # tk: largest 128-multiple <= block_k that divides nf_pad.
        tk = min(_round_up(block_k, 128), nf_pad)
        while nf_pad % tk:
            tk -= 128
        kernel = _fc_ktiled_kernel
        grid = (b_pad // tm, nf_pad // tk)
        in_specs = [
            pl.BlockSpec((tm, tk), lambda i, k: (i, k)),    # x tile per (i, k)
            pl.BlockSpec((nh, tk), lambda i, k: (0, k)),    # w1 streamed over K
            pl.BlockSpec((no, nh), lambda i, k: (0, 0)),    # w2 resident
        ]
        out_specs = pl.BlockSpec((no, tm), lambda i, k: (0, i))
        scratch_shapes = [pltpu.VMEM((nh, tm), jnp.float32)]  # flipped acc
        dim_sem = ("parallel", "arbitrary")
        vmem_need = (
            2 * tm * tk * itemsize
            + 2 * nh * tk * w_itemsize
            + 2 * no * nh * w_itemsize
            + 2 * no * tm * out_itemsize
            + nh * tm * 4
        )

    # Actual need + ~25% headroom (plus 1 MiB), floored at the v5e default
    # scoped VMEM and capped well under v7x's 64 MiB physical.
    vmem_limit = int(min(max(int(1.25 * vmem_need) + (1 << 20), 16 << 20),
                         vmem_soft_cap))

    cost = pl.CostEstimate(
        flops=2 * b_pad * nf_pad * nh + 2 * b_pad * nh * no,
        transcendentals=0,
        bytes_accessed=(
            x_flat.size * itemsize
            + w1.size * w_itemsize
            + w2.size * w_itemsize
            + no * b_pad * out_itemsize
        ),
    )

    out = pl.pallas_call(
        kernel,
        out_shape=jax.ShapeDtypeStruct((no, b_pad), out_dtype),
        grid_spec=pltpu.PrefetchScalarGridSpec(
            num_scalar_prefetch=0,
            grid=grid,
            in_specs=in_specs,
            out_specs=out_specs,
            scratch_shapes=scratch_shapes,
        ),
        compiler_params=pltpu.CompilerParams(
            dimension_semantics=dim_sem,
            vmem_limit_bytes=vmem_limit,
        ),
        cost_estimate=cost,
    )(x_flat, w1, w2)

    if no == 1:
        return out[0, :B]       # matches .squeeze(1)
    return out[:, :B].T         # (B, num_output); squeeze(1) is a no-op here


if __name__ == "__main__":
    # Small shapes consistent with the module: x is (B, C, H, W) so that
    # num_input = C*H*W after flatten.
    B, C, Hs, Ws = 2, 4, 16, 16
    num_input = C * Hs * Ws        # 1024
    num_hidden_1 = 32
    num_output = 1                 # squeeze(1) implies the scalar head

    key = jax.random.PRNGKey(0)
    kx, k1, k2 = jax.random.split(key, 3)

    x = jax.random.normal(kx, (B, C, Hs, Ws), dtype=jnp.float32)
    # Deterministic synthetic weights (PyTorch Linear layout: (out, in)).
    w1 = jax.random.normal(k1, (num_hidden_1, num_input), dtype=jnp.float32) * 0.02
    w2 = jax.random.normal(k2, (num_output, num_hidden_1), dtype=jnp.float32) * 0.02

    y = jax.block_until_ready(fc_net_1_forward(x, w1, w2))

    # Sanity-check against a pure-JAX reference of the PyTorch forward.
    y_ref = (x.reshape(B, -1) @ w1.T @ w2.T).squeeze(1)
    assert y.shape == y_ref.shape, (y.shape, y_ref.shape)
    assert jnp.allclose(y, y_ref, rtol=1e-5, atol=1e-5), (y, y_ref)

    print("KERNEL_OK")
</pallas_src>

<mosaic_0001>
module attributes {stable_mosaic.version = 11 : i64} {
  func.func @_fc_single_kernel(%arg0: i32, %arg1: memref<8x1024xf32, #tpu.memory_space<vmem>>, %arg2: memref<32x1024xf32, #tpu.memory_space<vmem>>, %arg3: memref<1x32xf32, #tpu.memory_space<vmem>>, %arg4: memref<1x8xf32, #tpu.memory_space<vmem>>) attributes {dimension_semantics = [#tpu.dimension_semantics<parallel>], iteration_bounds = array<i64: 1>, scalar_prefetch = 0 : i64, scratch_operands = 0 : i64, tpu.core_type = #tpu.core_type<tc>, window_params = [{transform_indices = @transform_0, window_bounds = array<i64: 8, 1024>}, {pipeline_mode = #tpu.pipeline_mode<synchronous>, transform_indices = @transform_1, window_bounds = array<i64: 32, 1024>}, {pipeline_mode = #tpu.pipeline_mode<synchronous>, transform_indices = @transform_2, window_bounds = array<i64: 1, 32>}, {transform_indices = @transform_3, window_bounds = array<i64: 1, 8>}]} {
    %c0 = arith.constant 0 : index
    %c0_0 = arith.constant 0 : index
    %0 = vector.load %arg2[%c0, %c0_0] : memref<32x1024xf32, #tpu.memory_space<vmem>>, vector<32x1024xf32>
    %c0_1 = arith.constant 0 : index
    %c0_2 = arith.constant 0 : index
    %1 = vector.load %arg1[%c0_1, %c0_2] : memref<8x1024xf32, #tpu.memory_space<vmem>>, vector<8x1024xf32>
    %cst = arith.constant dense<0.000000e+00> : vector<32x8xf32>
    %2 = tpu.matmul %0, %1, %cst {dimension_numbers = #tpu.dot_dimension_numbers<[1], [1], [0], [0], [0, 0, 1, 0], [], []>} : vector<32x1024xf32>, vector<8x1024xf32>, vector<32x8xf32> -> vector<32x8xf32>
    %c0_3 = arith.constant 0 : index
    %c0_4 = arith.constant 0 : index
    %3 = vector.load %arg3[%c0_3, %c0_4] : memref<1x32xf32, #tpu.memory_space<vmem>>, vector<1x32xf32>
    %cst_5 = arith.constant dense<0.000000e+00> : vector<1x8xf32>
    %4 = tpu.matmul %3, %2, %cst_5 {dimension_numbers = #tpu.dot_dimension_numbers<[1], [0], [0], [1], [0, 0, 1, 1], [], []>} : vector<1x32xf32>, vector<32x8xf32>, vector<1x8xf32> -> vector<1x8xf32>
    %c0_6 = arith.constant 0 : index
    %c0_7 = arith.constant 0 : index
    %5 = vector.load %arg4[%c0_6, %c0_7] : memref<1x8xf32, #tpu.memory_space<vmem>>, vector<1x8xf32>
    tpu.vector_store %arg4[%c0_6, %c0_7], %4 {strides = array<i32>} : memref<1x8xf32, #tpu.memory_space<vmem>>, vector<1x8xf32>,
    return
  }
  func.func @transform_0(%arg0: i32) -> (i32, i32) {
    %c0_i32 = arith.constant 0 : i32
    %c0_i32_0 = arith.constant 0 : i32
    return %arg0, %c0_i32 : i32, i32
  }
  func.func @transform_1(%arg0: i32) -> (i32, i32) {
    %c0_i32 = arith.constant 0 : i32
    %c0_i32_0 = arith.constant 0 : i32
    %c0_i32_1 = arith.constant 0 : i32
    return %c0_i32, %c0_i32_0 : i32, i32
  }
  func.func @transform_2(%arg0: i32) -> (i32, i32) {
    %c0_i32 = arith.constant 0 : i32
    %c0_i32_0 = arith.constant 0 : i32
    %c0_i32_1 = arith.constant 0 : i32
    return %c0_i32, %c0_i32_0 : i32, i32
  }
  func.func @transform_3(%arg0: i32) -> (i32, i32) {
    %c0_i32 = arith.constant 0 : i32
    %c0_i32_0 = arith.constant 0 : i32
    return %c0_i32, %arg0 : i32, i32
  }
}

</mosaic_0001>

<llo_original>
// kernel: tpu_custom_call.1
$region0: #{tpu_custom_call.1}
  #allocation0 [shape = 'u32[]', space=smem, size = 0x4, offset = 0x4, fixed_abs, tag = 'smem constant byte address 0x4 - core index']
  #allocation1 [shape = 'u32[144,128]{1,0:T(1,128)}', space=vmem, size = 0x12000, scoped, tag = 'internal scratch']
  %s0 = inlined_call_operand.hbm [shape: f32[8,1024], index: 0, kind: input, shape index: {}]
  %s1 = inlined_call_operand.hbm [shape: f32[32,1024], index: 1, kind: input, shape index: {}]
  %s2 = inlined_call_operand.vmem [shape: f32[1,32], index: 2, kind: input, shape index: {}]
  %s3 = inlined_call_operand.hbm [shape: f32[1,8], index: 3, kind: output, shape index: {}]
  %s4 = sld [smem:[#allocation0]]
  $region30: #{tpu_custom_call.1} parent=0
    _
  %s6 = ssub.s32 1, %s4
  %s7 = scalar_select 0, %s6, %s4
  $region1: #{tpu_custom_call.1} parent=0
    #allocation2 [shape = 'u8[32768]{0}', space=vmem, size = 0x8000, scoped, tag = 'input window, operand 0, single buffered']
    #allocation3 [shape = 's32[1]{0}', space=sflag, size = 0x4, scoped, tag = 'scoped memory for tpu_custom_call.1']
    #allocation4 [shape = 's32[1]{0}', space=sflag, size = 0x4, scoped, tag = 'scoped memory for tpu_custom_call.1']
    #allocation5 [shape = 'u8[131072]{0}', space=vmem, size = 0x20000, scoped, tag = 'input window, operand 1, single buffered']
    #allocation6 [shape = 's32[1]{0}', space=sflag, size = 0x4, scoped, tag = 'scoped memory for tpu_custom_call.1']
    #allocation7 [shape = 'u8[512]{0}', space=vmem, size = 0x400, scoped, tag = 'output window, operand 0, single buffered']
    %8 = vsyncpa [#allocation3], 0
    %9 = vsyncpa [#allocation6], 0
    %10 = vsyncpa [#allocation4], 0
    // Predicated region
    $region2: #{tpu_custom_call.1} parent=1 // pred_check
      _
    $region3: #{tpu_custom_call.1} parent=1 // pred_check_branch
      %12 = sbr.rel (0) target = $region5
    $region4: #{tpu_custom_call.1} parent=1 // pred_region
      %s14 = ssub.s32 1024, 1024
      %15 = vsyncadd [#allocation3], %s14
      %s17 = sshll.u32 [#allocation2], 4
      %s18 = int_to_ptr.vmem [resolvable:$true] %s17
      %20 = dma.hbm_to_vmem [thread:$0]  %s0, 1024, %s18, [#allocation3]
    $region5: #{tpu_custom_call.1} parent=1 // pred_fallthru
      _
    // Predicated region
    $region6: #{tpu_custom_call.1} parent=1 // pred_check
      _
    $region7: #{tpu_custom_call.1} parent=1 // pred_check_branch
      %22 = sbr.rel (0) target = $region9
    $region8: #{tpu_custom_call.1} parent=1 // pred_region
      %s24 = ssub.s32 4096, 4096
      %25 = vsyncadd [#allocation6], %s24
      %s26 = sshll.u32 [#allocation5], 4
      %s27 = int_to_ptr.vmem [resolvable:$true] %s26
      %32 = dma.hbm_to_vmem [thread:$0]  %s1, 4096, %s27, [#allocation6], 1024, 1024, 64
    $region9: #{tpu_custom_call.1} parent=1 // pred_fallthru
      _
    // Predicated region
    $region10: #{tpu_custom_call.1} parent=1 // pred_check
      _
    $region11: #{tpu_custom_call.1} parent=1 // pred_check_branch
      %34 = sbr.rel (0) target = $region13
    $region12: #{tpu_custom_call.1} parent=1 // pred_region
      _
    $region13: #{tpu_custom_call.1} parent=1 // pred_fallthru
      _
    // Predicated region
    $region14: #{tpu_custom_call.1} parent=1 // pred_check
      _
    $region15: #{tpu_custom_call.1} parent=1 // pred_check_branch
      %36 = sbr.rel (0) target = $region17
    $region16: #{tpu_custom_call.1} parent=1 // pred_region
      %37 = dma.done [#allocation3], 1024
    $region17: #{tpu_custom_call.1} parent=1 // pred_fallthru
      _
    // Predicated region
    $region18: #{tpu_custom_call.1} parent=1 // pred_check
      _
    $region19: #{tpu_custom_call.1} parent=1 // pred_check_branch
      %39 = sbr.rel (0) target = $region21
    $region20: #{tpu_custom_call.1} parent=1 // pred_region
      %40 = dma.done [#allocation6], 4096
    $region21: #{tpu_custom_call.1} parent=1 // pred_fallthru
      _
    %v41 = vld [vmem:[#allocation5] sm:$0xff]
    %v42 = vld [vmem:[#allocation5 + $0x8] sm:$0xff]
    %v43 = vld [vmem:[#allocation5 + $0x10] sm:$0xff]
    %v44 = vld [vmem:[#allocation5 + $0x18] sm:$0xff]
    %v45 = vld [vmem:[#allocation5 + $0x20] sm:$0xff]
    %v46 = vld [vmem:[#allocation5 + $0x28] sm:$0xff]
    %v47 = vld [vmem:[#allocation5 + $0x30] sm:$0xff]
    %v48 = vld [vmem:[#allocation5 + $0x38] sm:$0xff]
    %v49 = vld [vmem:[#allocation5 + $0x40] sm:$0xff]
    %v50 = vld [vmem:[#allocation5 + $0x48] sm:$0xff]
    %v51 = vld [vmem:[#allocation5 + $0x50] sm:$0xff]
    %v52 = vld [vmem:[#allocation5 + $0x58] sm:$0xff]
    %v53 = vld [vmem:[#allocation5 + $0x60] sm:$0xff]
    %v54 = vld [vmem:[#allocation5 + $0x68] sm:$0xff]
    %v55 = vld [vmem:[#allocation5 + $0x70] sm:$0xff]
    %v56 = vld [vmem:[#allocation5 + $0x78] sm:$0xff]
    %v57 = vld [vmem:[#allocation5 + $0x80] sm:$0xff]
    %v58 = vld [vmem:[#allocation5 + $0x88] sm:$0xff]
    %v59 = vld [vmem:[#allocation5 + $0x90] sm:$0xff]
    %v60 = vld [vmem:[#allocation5 + $0x98] sm:$0xff]
    %v61 = vld [vmem:[#allocation5 + $0xa0] sm:$0xff]
    %v62 = vld [vmem:[#allocation5 + $0xa8] sm:$0xff]
    %v63 = vld [vmem:[#allocation5 + $0xb0] sm:$0xff]
    %v64 = vld [vmem:[#allocation5 + $0xb8] sm:$0xff]
    %v65 = vld [vmem:[#allocation5 + $0xc0] sm:$0xff]
    %v66 = vld [vmem:[#allocation5 + $0xc8] sm:$0xff]
    %v67 = vld [vmem:[#allocation5 + $0xd0] sm:$0xff]
    %v68 = vld [vmem:[#allocation5 + $0xd8] sm:$0xff]
    %v69 = vld [vmem:[#allocation5 + $0xe0] sm:$0xff]
    %v70 = vld [vmem:[#allocation5 + $0xe8] sm:$0xff]
    %v71 = vld [vmem:[#allocation5 + $0xf0] sm:$0xff]
    %v72 = vld [vmem:[#allocation5 + $0xf8] sm:$0xff]
    %v73 = vld [vmem:[#allocation2] sm:$0xff]
    %v74 = vld [vmem:[#allocation2 + $0x8] sm:$0xff]
    %v75 = vld [vmem:[#allocation2 + $0x10] sm:$0xff]
    %v76 = vld [vmem:[#allocation2 + $0x18] sm:$0xff]
    %v77 = vld [vmem:[#allocation2 + $0x20] sm:$0xff]
    %v78 = vld [vmem:[#allocation2 + $0x28] sm:$0xff]
    %v79 = vld [vmem:[#allocation2 + $0x30] sm:$0xff]
    %v80 = vld [vmem:[#allocation2 + $0x38] sm:$0xff]
    %81 = vmatprep.subr.mxu0 %v74
    %82 = vmatpush1.xpose.msra.mxu0 %v73
    %83 = vmatprep.subr.mxu0 0.0
    %84 = vmatpush1.xpose.msra.mxu0 0.0
    %85 = vmatprep.subr.mxu0 0.0
    %86 = vmatpush1.xpose.msra.mxu0 0.0
    %87 = vmatprep.subr.mxu0 0.0
    %88 = vmatpush1.xpose.msra.mxu0 0.0
    %89 = vmatprep.subr.mxu0 0.0
    %90 = vmatpush1.xpose.msra.mxu0 0.0
    %91 = vmatprep.subr.mxu0 0.0
    %92 = vmatpush1.xpose.msra.mxu0 0.0
    %93 = vmatprep.subr.mxu0 0.0
    %94 = vmatpush1.xpose.msra.mxu0 0.0
    %95 = vmatprep.subr.mxu0 0.0
    %96 = vmatpush1.xpose.msra.mxu0 0.0
    %97 = vmatprep.subr.mxu0 0.0
    %98 = vmatpush1.xpose.msra.mxu0 0.0
    %99 = vmatprep.subr.mxu0 0.0
    %100 = vmatpush1.xpose.msra.mxu0 0.0
    %101 = vmatprep.subr.mxu0 0.0
    %102 = vmatpush1.xpose.msra.mxu0 0.0
    %103 = vmatprep.subr.mxu0 0.0
    %104 = vmatpush1.xpose.msra.mxu0 0.0
    %105 = vmatprep.subr.mxu0 0.0
    %106 = vmatpush1.xpose.msra.mxu0 0.0
    %107 = vmatprep.subr.mxu0 0.0
    %108 = vmatpush1.xpose.msra.mxu0 0.0
    %109 = vmatprep.subr.mxu0 0.0
    %110 = vmatpush1.xpose.msra.mxu0 0.0
    %111 = vmatprep.subr.mxu0 0.0
    %112 = vmatpush1.xpose.msra.mxu0 0.0
    %113 = vmatprep.subr.mxu0 0.0
    %114 = vmatpush1.xpose.msra.mxu0 0.0
    %115 = vmatprep.subr.mxu0 0.0
    %116 = vmatpush1.xpose.msra.mxu0 0.0
    %117 = vmatprep.subr.mxu0 0.0
    %118 = vmatpush1.xpose.msra.mxu0 0.0
    %119 = vmatprep.subr.mxu0 0.0
    %120 = vmatpush1.xpose.msra.mxu0 0.0
    %121 = vmatprep.subr.mxu0 0.0
    %122 = vmatpush1.xpose.msra.mxu0 0.0
    %123 = vmatprep.subr.mxu0 0.0
    %124 = vmatpush1.xpose.msra.mxu0 0.0
    %125 = vmatprep.subr.mxu0 0.0
    %126 = vmatpush1.xpose.msra.mxu0 0.0
    %127 = vmatprep.subr.mxu0 0.0
    %128 = vmatpush1.xpose.msra.mxu0 0.0
    %129 = vmatprep.subr.mxu0 0.0
    %130 = vmatpush1.xpose.msra.mxu0 0.0
    %131 = vmatprep.subr.mxu0 0.0
    %132 = vmatpush1.xpose.msra.mxu0 0.0
    %133 = vmatprep.subr.mxu0 0.0
    %134 = vmatpush1.xpose.msra.mxu0 0.0
    %135 = vmatprep.subr.mxu0 0.0
    %136 = vmatpush1.xpose.msra.mxu0 0.0
    %137 = vmatprep.subr.mxu0 0.0
    %138 = vmatpush1.xpose.msra.mxu0 0.0
    %139 = vmatprep.subr.mxu0 0.0
    %140 = vmatpush1.xpose.msra.mxu0 0.0
    %141 = vmatprep.subr.mxu0 0.0
    %142 = vmatpush1.xpose.msra.mxu0 0.0
    %143 = vmatprep.subr.mxu0 0.0
    %144 = vmatpush1.xpose.msra.mxu0 0.0
    %145 = vmatprep.mubr.f32.mxu0 %v42
    %146 = vmatmul.mubr.f32.gmra.mrb[0].mxu0 %v41
    %v147 = vpop.f32.mrb[0].mxu0
    %v148 = vadd.f32 0.0, %v147
    %v149 = vpop.f32.mrb[0].mxu0
    %150 = vmatprep.mubr.f32.mxu0 %v50
    %151 = vmatmul.mubr.f32.gmra.mrb[0].mxu0 %v49
    %v152 = vpop.f32.mrb[0].mxu0
    %v153 = vadd.f32 0.0, %v152
    %v154 = vpop.f32.mrb[0].mxu0
    %155 = vmatprep.mubr.f32.mxu0 %v58
    %156 = vmatmul.mubr.f32.gmra.mrb[0].mxu0 %v57
    %v157 = vpop.f32.mrb[0].mxu0
    %v158 = vadd.f32 0.0, %v157
    %v159 = vpop.f32.mrb[0].mxu0
    %160 = vmatprep.mubr.f32.mxu0 %v66
    %161 = vmatmul.mubr.f32.gmra.mrb[0].mxu0 %v65
    %v162 = vpop.f32.mrb[0].mxu0
    %v163 = vadd.f32 0.0, %v162
    %v164 = vpop.f32.mrb[0].mxu0
    %165 = vdwg.mxu0
    %166 = vmatprep.subr.mxu0 %v76
    %167 = vmatpush1.xpose.msra.mxu0 %v75
    %168 = vmatprep.subr.mxu0 0.0
    %169 = vmatpush1.xpose.msra.mxu0 0.0
    %170 = vmatprep.subr.mxu0 0.0
    %171 = vmatpush1.xpose.msra.mxu0 0.0
    %172 = vmatprep.subr.mxu0 0.0
    %173 = vmatpush1.xpose.msra.mxu0 0.0
    %174 = vmatprep.subr.mxu0 0.0
    %175 = vmatpush1.xpose.msra.mxu0 0.0
    %176 = vmatprep.subr.mxu0 0.0
    %177 = vmatpush1.xpose.msra.mxu0 0.0
    %178 = vmatprep.subr.mxu0 0.0
    %179 = vmatpush1.xpose.msra.mxu0 0.0
    %180 = vmatprep.subr.mxu0 0.0
    %181 = vmatpush1.xpose.msra.mxu0 0.0
    %182 = vmatprep.subr.mxu0 0.0
    %183 = vmatpush1.xpose.msra.mxu0 0.0
    %184 = vmatprep.subr.mxu0 0.0
    %185 = vmatpush1.xpose.msra.mxu0 0.0
    %186 = vmatprep.subr.mxu0 0.0
    %187 = vmatpush1.xpose.msra.mxu0 0.0
    %188 = vmatprep.subr.mxu0 0.0
    %189 = vmatpush1.xpose.msra.mxu0 0.0
    %190 = vmatprep.subr.mxu0 0.0
    %191 = vmatpush1.xpose.msra.mxu0 0.0
    %192 = vmatprep.subr.mxu0 0.0
    %193 = vmatpush1.xpose.msra.mxu0 0.0
    %194 = vmatprep.subr.mxu0 0.0
    %195 = vmatpush1.xpose.msra.mxu0 0.0
    %196 = vmatprep.subr.mxu0 0.0
    %197 = vmatpush1.xpose.msra.mxu0 0.0
    %198 = vmatprep.subr.mxu0 0.0
    %199 = vmatpush1.xpose.msra.mxu0 0.0
    %200 = vmatprep.subr.mxu0 0.0
    %201 = vmatpush1.xpose.msra.mxu0 0.0
    %202 = vmatprep.subr.mxu0 0.0
    %203 = vmatpush1.xpose.msra.mxu0 0.0
    %204 = vmatprep.subr.mxu0 0.0
    %205 = vmatpush1.xpose.msra.mxu0 0.0
    %206 = vmatprep.subr.mxu0 0.0
    %207 = vmatpush1.xpose.msra.mxu0 0.0
    %208 = vmatprep.subr.mxu0 0.0
    %209 = vmatpush1.xpose.msra.mxu0 0.0
    %210 = vmatprep.subr.mxu0 0.0
    %211 = vmatpush1.xpose.msra.mxu0 0.0
    %212 = vmatprep.subr.mxu0 0.0
    %213 = vmatpush1.xpose.msra.mxu0 0.0
    %214 = vmatprep.subr.mxu0 0.0
    %215 = vmatpush1.xpose.msra.mxu0 0.0
    %216 = vmatprep.subr.mxu0 0.0
    %217 = vmatpush1.xpose.msra.mxu0 0.0
    %218 = vmatprep.subr.mxu0 0.0
    %219 = vmatpush1.xpose.msra.mxu0 0.0
    %220 = vmatprep.subr.mxu0 0.0
    %221 = vmatpush1.xpose.msra.mxu0 0.0
    %222 = vmatprep.subr.mxu0 0.0
    %223 = vmatpush1.xpose.msra.mxu0 0.0
    %224 = vmatprep.subr.mxu0 0.0
    %225 = vmatpush1.xpose.msra.mxu0 0.0
    %226 = vmatprep.subr.mxu0 0.0
    %227 = vmatpush1.xpose.msra.mxu0 0.0
    %228 = vmatprep.subr.mxu0 0.0
    %229 = vmatpush1.xpose.msra.mxu0 0.0
    %230 = vmatprep.mubr.f32.mxu0 %v44
    %231 = vmatmul.mubr.f32.gmra.mrb[0].mxu0 %v43
    %v232 = vpop.f32.mrb[0].mxu0
    %v233 = vadd.f32 %v148, %v232
    %v234 = vpop.f32.mrb[0].mxu0
    %235 = vmatprep.mubr.f32.mxu0 %v52
    %236 = vmatmul.mubr.f32.gmra.mrb[0].mxu0 %v51
    %v237 = vpop.f32.mrb[0].mxu0
    %v238 = vadd.f32 %v153, %v237
    %v239 = vpop.f32.mrb[0].mxu0
    %240 = vmatprep.mubr.f32.mxu0 %v60
    %241 = vmatmul.mubr.f32.gmra.mrb[0].mxu0 %v59
    %v242 = vpop.f32.mrb[0].mxu0
    %v243 = vadd.f32 %v158, %v242
    %v244 = vpop.f32.mrb[0].mxu0
    %245 = vmatprep.mubr.f32.mxu0 %v68
    %246 = vmatmul.mubr.f32.gmra.mrb[0].mxu0 %v67
    %v247 = vpop.f32.mrb[0].mxu0
    %v248 = vadd.f32 %v163, %v247
    %v249 = vpop.f32.mrb[0].mxu0
    %250 = vdwg.mxu0
    %251 = vmatprep.subr.mxu0 %v78
    %252 = vmatpush1.xpose.msra.mxu0 %v77
    %253 = vmatprep.subr.mxu0 0.0
    %254 = vmatpush1.xpose.msra.mxu0 0.0
    %255 = vmatprep.subr.mxu0 0.0
    %256 = vmatpush1.xpose.msra.mxu0 0.0
    %257 = vmatprep.subr.mxu0 0.0
    %258 = vmatpush1.xpose.msra.mxu0 0.0
    %259 = vmatprep.subr.mxu0 0.0
    %260 = vmatpush1.xpose.msra.mxu0 0.0
    %261 = vmatprep.subr.mxu0 0.0
    %262 = vmatpush1.xpose.msra.mxu0 0.0
    %263 = vmatprep.subr.mxu0 0.0
    %264 = vmatpush1.xpose.msra.mxu0 0.0
    %265 = vmatprep.subr.mxu0 0.0
    %266 = vmatpush1.xpose.msra.mxu0 0.0
    %267 = vmatprep.subr.mxu0 0.0
    %268 = vmatpush1.xpose.msra.mxu0 0.0
    %269 = vmatprep.subr.mxu0 0.0
    %270 = vmatpush1.xpose.msra.mxu0 0.0
    %271 = vmatprep.subr.mxu0 0.0
    %272 = vmatpush1.xpose.msra.mxu0 0.0
    %273 = vmatprep.subr.mxu0 0.0
    %274 = vmatpush1.xpose.msra.mxu0 0.0
    %275 = vmatprep.subr.mxu0 0.0
    %276 = vmatpush1.xpose.msra.mxu0 0.0
    %277 = vmatprep.subr.mxu0 0.0
    %278 = vmatpush1.xpose.msra.mxu0 0.0
    %279 = vmatprep.subr.mxu0 0.0
    %280 = vmatpush1.xpose.msra.mxu0 0.0
    %281 = vmatprep.subr.mxu0 0.0
    %282 = vmatpush1.xpose.msra.mxu0 0.0
    %283 = vmatprep.subr.mxu0 0.0
    %284 = vmatpush1.xpose.msra.mxu0 0.0
    %285 = vmatprep.subr.mxu0 0.0
    %286 = vmatpush1.xpose.msra.mxu0 0.0
    %287 = vmatprep.subr.mxu0 0.0
    %288 = vmatpush1.xpose.msra.mxu0 0.0
    %289 = vmatprep.subr.mxu0 0.0
    %290 = vmatpush1.xpose.msra.mxu0 0.0
    %291 = vmatprep.subr.mxu0 0.0
    %292 = vmatpush1.xpose.msra.mxu0 0.0
    %293 = vmatprep.subr.mxu0 0.0
    %294 = vmatpush1.xpose.msra.mxu0 0.0
    %295 = vmatprep.subr.mxu0 0.0
    %296 = vmatpush1.xpose.msra.mxu0 0.0
    %297 = vmatprep.subr.mxu0 0.0
    %298 = vmatpush1.xpose.msra.mxu0 0.0
    %299 = vmatprep.subr.mxu0 0.0
    %300 = vmatpush1.xpose.msra.mxu0 0.0
    %301 = vmatprep.subr.mxu0 0.0
    %302 = vmatpush1.xpose.msra.mxu0 0.0
    %303 = vmatprep.subr.mxu0 0.0
    %304 = vmatpush1.xpose.msra.mxu0 0.0
    %305 = vmatprep.subr.mxu0 0.0
    %306 = vmatpush1.xpose.msra.mxu0 0.0
    %307 = vmatprep.subr.mxu0 0.0
    %308 = vmatpush1.xpose.msra.mxu0 0.0
    %309 = vmatprep.subr.mxu0 0.0
    %310 = vmatpush1.xpose.msra.mxu0 0.0
    %311 = vmatprep.subr.mxu0 0.0
    %312 = vmatpush1.xpose.msra.mxu0 0.0
    %313 = vmatprep.subr.mxu0 0.0
    %314 = vmatpush1.xpose.msra.mxu0 0.0
    %315 = vmatprep.mubr.f32.mxu0 %v46
    %316 = vmatmul.mubr.f32.gmra.mrb[0].mxu0 %v45
    %v317 = vpop.f32.mrb[0].mxu0
    %v318 = vadd.f32 %v233, %v317
    %v319 = vpop.f32.mrb[0].mxu0
    %320 = vmatprep.mubr.f32.mxu0 %v54
    %321 = vmatmul.mubr.f32.gmra.mrb[0].mxu0 %v53
    %v322 = vpop.f32.mrb[0].mxu0
    %v323 = vadd.f32 %v238, %v322
    %v324 = vpop.f32.mrb[0].mxu0
    %325 = vmatprep.mubr.f32.mxu0 %v62
    %326 = vmatmul.mubr.f32.gmra.mrb[0].mxu0 %v61
    %v327 = vpop.f32.mrb[0].mxu0
    %v328 = vadd.f32 %v243, %v327
    %v329 = vpop.f32.mrb[0].mxu0
    %330 = vmatprep.mubr.f32.mxu0 %v70
    %331 = vmatmul.mubr.f32.gmra.mrb[0].mxu0 %v69
    %v332 = vpop.f32.mrb[0].mxu0
    %v333 = vadd.f32 %v248, %v332
    %v334 = vpop.f32.mrb[0].mxu0
    %335 = vdwg.mxu0
    %336 = vmatprep.subr.mxu0 %v80
    %337 = vmatpush1.xpose.msra.mxu0 %v79
    %338 = vmatprep.subr.mxu0 0.0
    %339 = vmatpush1.xpose.msra.mxu0 0.0
    %340 = vmatprep.subr.mxu0 0.0
    %341 = vmatpush1.xpose.msra.mxu0 0.0
    %342 = vmatprep.subr.mxu0 0.0
    %343 = vmatpush1.xpose.msra.mxu0 0.0
    %344 = vmatprep.subr.mxu0 0.0
    %345 = vmatpush1.xpose.msra.mxu0 0.0
    %346 = vmatprep.subr.mxu0 0.0
    %347 = vmatpush1.xpose.msra.mxu0 0.0
    %348 = vmatprep.subr.mxu0 0.0
    %349 = vmatpush1.xpose.msra.mxu0 0.0
    %350 = vmatprep.subr.mxu0 0.0
    %351 = vmatpush1.xpose.msra.mxu0 0.0
    %352 = vmatprep.subr.mxu0 0.0
    %353 = vmatpush1.xpose.msra.mxu0 0.0
    %354 = vmatprep.subr.mxu0 0.0
    %355 = vmatpush1.xpose.msra.mxu0 0.0
    %356 = vmatprep.subr.mxu0 0.0
    %357 = vmatpush1.xpose.msra.mxu0 0.0
    %358 = vmatprep.subr.mxu0 0.0
    %359 = vmatpush1.xpose.msra.mxu0 0.0
    %360 = vmatprep.subr.mxu0 0.0
    %361 = vmatpush1.xpose.msra.mxu0 0.0
    %362 = vmatprep.subr.mxu0 0.0
    %363 = vmatpush1.xpose.msra.mxu0 0.0
    %364 = vmatprep.subr.mxu0 0.0
    %365 = vmatpush1.xpose.msra.mxu0 0.0
    %366 = vmatprep.subr.mxu0 0.0
    %367 = vmatpush1.xpose.msra.mxu0 0.0
    %368 = vmatprep.subr.mxu0 0.0
    %369 = vmatpush1.xpose.msra.mxu0 0.0
    %370 = vmatprep.subr.mxu0 0.0
    %371 = vmatpush1.xpose.msra.mxu0 0.0
    %372 = vmatprep.subr.mxu0 0.0
    %373 = vmatpush1.xpose.msra.mxu0 0.0
    %374 = vmatprep.subr.mxu0 0.0
    %375 = vmatpush1.xpose.msra.mxu0 0.0
    %376 = vmatprep.subr.mxu0 0.0
    %377 = vmatpush1.xpose.msra.mxu0 0.0
    %378 = vmatprep.subr.mxu0 0.0
    %379 = vmatpush1.xpose.msra.mxu0 0.0
    %380 = vmatprep.subr.mxu0 0.0
    %381 = vmatpush1.xpose.msra.mxu0 0.0
    %382 = vmatprep.subr.mxu0 0.0
    %383 = vmatpush1.xpose.msra.mxu0 0.0
    %384 = vmatprep.subr.mxu0 0.0
    %385 = vmatpush1.xpose.msra.mxu0 0.0
    %386 = vmatprep.subr.mxu0 0.0
    %387 = vmatpush1.xpose.msra.mxu0 0.0
    %388 = vmatprep.subr.mxu0 0.0
    %389 = vmatpush1.xpose.msra.mxu0 0.0
    %390 = vmatprep.subr.mxu0 0.0
    %391 = vmatpush1.xpose.msra.mxu0 0.0
    %392 = vmatprep.subr.mxu0 0.0
    %393 = vmatpush1.xpose.msra.mxu0 0.0
    %394 = vmatprep.subr.mxu0 0.0
    %395 = vmatpush1.xpose.msra.mxu0 0.0
    %396 = vmatprep.subr.mxu0 0.0
    %397 = vmatpush1.xpose.msra.mxu0 0.0
    %398 = vmatprep.subr.mxu0 0.0
    %399 = vmatpush1.xpose.msra.mxu0 0.0
    %400 = vmatprep.mubr.f32.mxu0 %v48
    %401 = vmatmul.mubr.f32.gmra.mrb[0].mxu0 %v47
    %v402 = vpop.f32.mrb[0].mxu0
    %v403 = vadd.f32 %v318, %v402
    %v404 = vpop.f32.mrb[0].mxu0
    %405 = vmatprep.mubr.f32.mxu0 %v56
    %406 = vmatmul.mubr.f32.gmra.mrb[0].mxu0 %v55
    %v407 = vpop.f32.mrb[0].mxu0
    %v408 = vadd.f32 %v323, %v407
    %v409 = vpop.f32.mrb[0].mxu0
    %410 = vmatprep.mubr.f32.mxu0 %v64
    %411 = vmatmul.mubr.f32.gmra.mrb[0].mxu0 %v63
    %v412 = vpop.f32.mrb[0].mxu0
    %v413 = vadd.f32 %v328, %v412
    %v414 = vpop.f32.mrb[0].mxu0
    %415 = vmatprep.mubr.f32.mxu0 %v72
    %416 = vmatmul.mubr.f32.gmra.mrb[0].mxu0 %v71
    %v417 = vpop.f32.mrb[0].mxu0
    %v418 = vadd.f32 %v333, %v417
    %v419 = vpop.f32.mrb[0].mxu0
    %420 = vdwg.mxu0
    %v421 = vld [vmem:[%s2] sm:$0x1]
    %vm422 = vcmask 261120
    %v424 = vsel %vm422, %v421, 0
    %426 = vmatprep.subr.mxu0 0.0
    %427 = vmatpush1.msra.mxu0 %v403
    %428 = vmatprep.subr.mxu0 0.0
    %429 = vmatpush1.msra.mxu0 %v408
    %430 = vmatprep.subr.mxu0 0.0
    %431 = vmatpush1.msra.mxu0 %v413
    %432 = vmatprep.subr.mxu0 0.0
    %433 = vmatpush1.msra.mxu0 %v418
    %434 = vmatprep.subr.mxu0 0.0
    %435 = vmatpush1.msra.mxu0 0.0
    %436 = vmatprep.subr.mxu0 0.0
    %437 = vmatpush1.msra.mxu0 0.0
    %438 = vmatprep.subr.mxu0 0.0
    %439 = vmatpush1.msra.mxu0 0.0
    %440 = vmatprep.subr.mxu0 0.0
    %441 = vmatpush1.msra.mxu0 0.0
    %442 = vmatprep.subr.mxu0 0.0
    %443 = vmatpush1.msra.mxu0 0.0
    %444 = vmatprep.subr.mxu0 0.0
    %445 = vmatpush1.msra.mxu0 0.0
    %446 = vmatprep.subr.mxu0 0.0
    %447 = vmatpush1.msra.mxu0 0.0
    %448 = vmatprep.subr.mxu0 0.0
    %449 = vmatpush1.msra.mxu0 0.0
    %450 = vmatprep.subr.mxu0 0.0
    %451 = vmatpush1.msra.mxu0 0.0
    %452 = vmatprep.subr.mxu0 0.0
    %453 = vmatpush1.msra.mxu0 0.0
    %454 = vmatprep.subr.mxu0 0.0
    %455 = vmatpush1.msra.mxu0 0.0
    %456 = vmatprep.subr.mxu0 0.0
    %457 = vmatpush1.msra.mxu0 0.0
    %458 = vmatprep.subr.mxu0 0.0
    %459 = vmatpush1.msra.mxu0 0.0
    %460 = vmatprep.subr.mxu0 0.0
    %461 = vmatpush1.msra.mxu0 0.0
    %462 = vmatprep.subr.mxu0 0.0
    %463 = vmatpush1.msra.mxu0 0.0
    %464 = vmatprep.subr.mxu0 0.0
    %465 = vmatpush1.msra.mxu0 0.0
    %466 = vmatprep.subr.mxu0 0.0
    %467 = vmatpush1.msra.mxu0 0.0
    %468 = vmatprep.subr.mxu0 0.0
    %469 = vmatpush1.msra.mxu0 0.0
    %470 = vmatprep.subr.mxu0 0.0
    %471 = vmatpush1.msra.mxu0 0.0
    %472 = vmatprep.subr.mxu0 0.0
    %473 = vmatpush1.msra.mxu0 0.0
    %474 = vmatprep.subr.mxu0 0.0
    %475 = vmatpush1.msra.mxu0 0.0
    %476 = vmatprep.subr.mxu0 0.0
    %477 = vmatpush1.msra.mxu0 0.0
    %478 = vmatprep.subr.mxu0 0.0
    %479 = vmatpush1.msra.mxu0 0.0
    %480 = vmatprep.subr.mxu0 0.0
    %481 = vmatpush1.msra.mxu0 0.0
    %482 = vmatprep.subr.mxu0 0.0
    %483 = vmatpush1.msra.mxu0 0.0
    %484 = vmatprep.subr.mxu0 0.0
    %485 = vmatpush1.msra.mxu0 0.0
    %486 = vmatprep.subr.mxu0 0.0
    %487 = vmatpush1.msra.mxu0 0.0
    %488 = vmatprep.subr.mxu0 0.0
    %489 = vmatpush1.msra.mxu0 0.0
    %490 = vmatprep.mubr.f32.mxu0 0.0
    %491 = vmatmul.mubr.f32.gmra.mrb[0].mxu0 %v424
    %v492 = vpop.f32.mrb[0].mxu0
    %v493 = vadd.f32 0.0, %v492
    %v494 = vpop.f32.mrb[0].mxu0
    %495 = vdwg.mxu0
    %vm496 = vcmask 57344
    %497 = vst.msk [vmem:[#allocation7] sm:$0x1] %vm496, %v493
    // Predicated region
    $region22: #{tpu_custom_call.1} parent=1 // pred_check
      _
    $region23: #{tpu_custom_call.1} parent=1 // pred_check_branch
      %499 = sbr.rel (0) target = $region25
    $region24: #{tpu_custom_call.1} parent=1 // pred_region
      %s501 = ssub.s32 16, 16
      %502 = vsyncadd [#allocation4], %s501
      %s504 = sshll.u32 [#allocation7], 4
      %s505 = int_to_ptr.vmem [resolvable:$true] %s504
      %507 = dma.vmem_to_hbm [thread:$0]  %s505, 16, %s3, [#allocation4]
    $region25: #{tpu_custom_call.1} parent=1 // pred_fallthru
      _
    // Predicated region
    $region26: #{tpu_custom_call.1} parent=1 // pred_check
      _
    $region27: #{tpu_custom_call.1} parent=1 // pred_check_branch
      %509 = sbr.rel (0) target = $region29
    $region28: #{tpu_custom_call.1} parent=1 // pred_region
      %510 = dma.done [#allocation4], 16
    $region29: #{tpu_custom_call.1} parent=1 // pred_fallthru
      _
    %511 = vsyncpa [#allocation3], 1
    %512 = vsyncpa [#allocation6], 1
    %513 = vsyncpa [#allocation4], 1

</llo_original>
